<compile_context>
chip_gen: v5e
topology: v5e:2x2
jax: 0.10.0
libtpu: 0.0.40
codegen_flags: <defaults>
</compile_context>

<pallas_src>
import functools

import jax
import jax.numpy as jnp
from jax import lax
from jax.experimental import pallas as pl
from jax.experimental.pallas import tpu as pltpu


def _conv_bn_lrelu_kernel(col_ref, w_ref, g_ref, b_ref, out_ref, *, eps, slope):
    """Fused ConvBlock forward for one whole (small) batch.

    col_ref : (N, K*K*Cin, Ho*Wo)  im2col'd, padded input (lane-dense minor dim)
    w_ref   : (Cout, K*K*Cin)      flattened conv weight
    g_ref   : (Cout, 1)            BN gamma
    b_ref   : (Cout, 1)            BN beta
    out_ref : (N, Cout, Ho*Wo)     result (reshaped to NCHW by the wrapper)
    """
    n_batch, c_out, hw = out_ref.shape

    # 1) Convolution: one lane-dense (Cout, Ho*Wo) MXU matmul per batch element.
    #    The conv bias is omitted: training-mode BatchNorm cancels it exactly.
    for n in range(n_batch):  # static unroll, N is small
        out_ref[n] = jnp.dot(
            w_ref[...], col_ref[n], preferred_element_type=jnp.float32
        )

    # 2) Training-mode batch statistics over (N, Ho*Wo), centered variance.
    y = out_ref[...]                                           # (N, Cout, HW)
    inv_count = 1.0 / float(n_batch * hw)
    y_nsum = jnp.sum(y, axis=0, keepdims=True)                 # (1, Cout, HW)
    mean = jnp.sum(y_nsum, axis=2, keepdims=True) * inv_count  # (1, Cout, 1)
    d = y - mean
    d2_nsum = jnp.sum(d * d, axis=0, keepdims=True)            # (1, Cout, HW)
    var = jnp.sum(d2_nsum, axis=2, keepdims=True) * inv_count  # (1, Cout, 1)

    # 3) Folded BN affine + LeakyReLU, single lane-dense store.
    scale = g_ref[...].reshape(1, c_out, 1) * lax.rsqrt(var + eps)
    shift = b_ref[...].reshape(1, c_out, 1) - mean * scale
    z = y * scale + shift
    out_ref[...] = jnp.where(z >= 0, z, slope * z)


def conv_block_forward(x_nchw, weight_oihw, bias, gamma, beta,
                       *, pad, dil, eps=1e-5, negative_slope=0.01):
    """ConvBlock forward (training-mode BatchNorm).  Returns NCHW."""
    del bias  # algebraically cancelled by training-mode BatchNorm
    N, Cin, H, W = x_nchw.shape
    Cout, _, KH, KW = weight_oihw.shape
    Ho = H + 2 * pad - dil * (KH - 1)
    Wo = W + 2 * pad - dil * (KW - 1)
    HW = Ho * Wo
    KKC = KH * KW * Cin

    x = x_nchw.astype(jnp.float32)
    x_pad = jnp.pad(x, ((0, 0), (0, 0), (pad, pad), (pad, pad)))

    # im2col (layout plumbing, done once by XLA): tap order (kh, kw), cin inner.
    cols = []
    for kh in range(KH):
        for kw in range(KW):
            patch = x_pad[:, :, kh * dil:kh * dil + Ho, kw * dil:kw * dil + Wo]
            cols.append(patch.reshape(N, Cin, HW))
    col = jnp.concatenate(cols, axis=1)                      # (N, KKC, HW)

    # Weight OIHW -> (Cout, KH, KW, Cin) -> (Cout, KKC), matching col ordering.
    w_flat = jnp.transpose(weight_oihw, (0, 2, 3, 1)) \
                .reshape(Cout, KKC).astype(jnp.float32)
    g2 = gamma.reshape(Cout, 1).astype(jnp.float32)
    b2 = beta.reshape(Cout, 1).astype(jnp.float32)

    out = pl.pallas_call(
        functools.partial(_conv_bn_lrelu_kernel, eps=eps, slope=negative_slope),
        out_shape=jax.ShapeDtypeStruct((N, Cout, HW), jnp.float32),
        grid=(1,),
        in_specs=[
            pl.BlockSpec((N, KKC, HW), lambda i: (0, 0, 0)),
            pl.BlockSpec((Cout, KKC), lambda i: (0, 0)),
            pl.BlockSpec((Cout, 1), lambda i: (0, 0)),
            pl.BlockSpec((Cout, 1), lambda i: (0, 0)),
        ],
        out_specs=pl.BlockSpec((N, Cout, HW), lambda i: (0, 0, 0)),
        compiler_params=pltpu.CompilerParams(
            dimension_semantics=("arbitrary",)),
    )(col, w_flat, g2, b2)

    # Free metadata reshape: (N, Cout, Ho*Wo) -> NCHW.
    return out.reshape(N, Cout, Ho, Wo)


def _reference(x_nchw, weight_oihw, bias, gamma, beta, *, pad, dil,
               eps=1e-5, slope=0.01):
    y = lax.conv_general_dilated(
        x_nchw, weight_oihw, window_strides=(1, 1),
        padding=[(pad, pad), (pad, pad)], rhs_dilation=(dil, dil),
        dimension_numbers=("NCHW", "OIHW", "NCHW"))
    y = y + bias.reshape(1, -1, 1, 1)
    mean = jnp.mean(y, axis=(0, 2, 3), keepdims=True)
    var = jnp.var(y, axis=(0, 2, 3), keepdims=True)
    z = (y - mean) / jnp.sqrt(var + eps) * gamma.reshape(1, -1, 1, 1) \
        + beta.reshape(1, -1, 1, 1)
    return jnp.where(z >= 0, z, slope * z)


if __name__ == "__main__":
    # ConvBlock(in_ch=4, out_ch=8, k_size=3, pad=2, dil=2) on a (2,4,16,16) input.
    N, Cin, H, W = 2, 4, 16, 16
    Cout, K, PAD, DIL = 8, 3, 2, 2

    key = jax.random.PRNGKey(0)
    kx, kw, kb, kg, kbeta = jax.random.split(key, 5)
    x = jax.random.normal(kx, (N, Cin, H, W), dtype=jnp.float32)
    weight = jax.random.normal(kw, (Cout, Cin, K, K), dtype=jnp.float32) * 0.1
    bias = jax.random.normal(kb, (Cout,), dtype=jnp.float32) * 0.1
    gamma = 1.0 + 0.1 * jax.random.normal(kg, (Cout,), dtype=jnp.float32)
    beta = 0.1 * jax.random.normal(kbeta, (Cout,), dtype=jnp.float32)

    out = conv_block_forward(x, weight, bias, gamma, beta, pad=PAD, dil=DIL)
    out = jax.block_until_ready(out)

    ref = _reference(x, weight, bias, gamma, beta, pad=PAD, dil=DIL)
    assert out.shape == (N, Cout, H, W), out.shape
    assert jnp.allclose(out, ref, atol=2e-3, rtol=2e-3), \
        float(jnp.max(jnp.abs(out - ref)))

    print("KERNEL_OK")
</pallas_src>

<mosaic_0001>
module attributes {stable_mosaic.version = 11 : i64} {
  func.func @_conv_bn_lrelu_kernel(%arg0: i32, %arg1: memref<2x36x256xf32, #tpu.memory_space<vmem>>, %arg2: memref<8x36xf32, #tpu.memory_space<vmem>>, %arg3: memref<8x1xf32, #tpu.memory_space<vmem>>, %arg4: memref<8x1xf32, #tpu.memory_space<vmem>>, %arg5: memref<2x8x256xf32, #tpu.memory_space<vmem>>) attributes {dimension_semantics = [#tpu.dimension_semantics<arbitrary>], iteration_bounds = array<i64: 1>, scalar_prefetch = 0 : i64, scratch_operands = 0 : i64, tpu.core_type = #tpu.core_type<tc>, window_params = [{pipeline_mode = #tpu.pipeline_mode<synchronous>, transform_indices = @transform_0, window_bounds = array<i64: 2, 36, 256>}, {pipeline_mode = #tpu.pipeline_mode<synchronous>, transform_indices = @transform_1, window_bounds = array<i64: 8, 36>}, {pipeline_mode = #tpu.pipeline_mode<synchronous>, transform_indices = @transform_2, window_bounds = array<i64: 8, 1>}, {pipeline_mode = #tpu.pipeline_mode<synchronous>, transform_indices = @transform_3, window_bounds = array<i64: 8, 1>}, {pipeline_mode = #tpu.pipeline_mode<synchronous>, transform_indices = @transform_4, window_bounds = array<i64: 2, 8, 256>}]} {
    %c0 = arith.constant 0 : index
    %c0_0 = arith.constant 0 : index
    %0 = vector.load %arg2[%c0, %c0_0] : memref<8x36xf32, #tpu.memory_space<vmem>>, vector<8x36xf32>
    %c0_1 = arith.constant 0 : index
    %c0_2 = arith.constant 0 : index
    %c0_3 = arith.constant 0 : index
    %1 = vector.load %arg1[%c0_1, %c0_2, %c0_3] : memref<2x36x256xf32, #tpu.memory_space<vmem>>, vector<1x36x256xf32>
    %2 = vector.shape_cast %1 : vector<1x36x256xf32> to vector<36x256xf32>
    %cst = arith.constant dense<0.000000e+00> : vector<8x256xf32>
    %3 = tpu.matmul %0, %2, %cst {dimension_numbers = #tpu.dot_dimension_numbers<[1], [0], [0], [1], [0, 0, 1, 1], [], []>} : vector<8x36xf32>, vector<36x256xf32>, vector<8x256xf32> -> vector<8x256xf32>
    %c0_4 = arith.constant 0 : index
    %c0_5 = arith.constant 0 : index
    %c0_6 = arith.constant 0 : index
    %4 = vector.load %arg5[%c0_4, %c0_5, %c0_6] : memref<2x8x256xf32, #tpu.memory_space<vmem>>, vector<1x8x256xf32>
    %5 = vector.shape_cast %4 : vector<1x8x256xf32> to vector<8x256xf32>
    %6 = vector.shape_cast %3 : vector<8x256xf32> to vector<1x8x256xf32>
    tpu.vector_store %arg5[%c0_4, %c0_5, %c0_6], %6 {strides = array<i32>} : memref<2x8x256xf32, #tpu.memory_space<vmem>>, vector<1x8x256xf32>,
    %c0_7 = arith.constant 0 : index
    %c0_8 = arith.constant 0 : index
    %7 = vector.load %arg2[%c0_7, %c0_8] : memref<8x36xf32, #tpu.memory_space<vmem>>, vector<8x36xf32>
    %c1 = arith.constant 1 : index
    %c0_9 = arith.constant 0 : index
    %c0_10 = arith.constant 0 : index
    %8 = vector.load %arg1[%c1, %c0_9, %c0_10] : memref<2x36x256xf32, #tpu.memory_space<vmem>>, vector<1x36x256xf32>
    %9 = vector.shape_cast %8 : vector<1x36x256xf32> to vector<36x256xf32>
    %cst_11 = arith.constant dense<0.000000e+00> : vector<8x256xf32>
    %10 = tpu.matmul %7, %9, %cst_11 {dimension_numbers = #tpu.dot_dimension_numbers<[1], [0], [0], [1], [0, 0, 1, 1], [], []>} : vector<8x36xf32>, vector<36x256xf32>, vector<8x256xf32> -> vector<8x256xf32>
    %c1_12 = arith.constant 1 : index
    %c0_13 = arith.constant 0 : index
    %c0_14 = arith.constant 0 : index
    %11 = vector.load %arg5[%c1_12, %c0_13, %c0_14] : memref<2x8x256xf32, #tpu.memory_space<vmem>>, vector<1x8x256xf32>
    %12 = vector.shape_cast %11 : vector<1x8x256xf32> to vector<8x256xf32>
    %13 = vector.shape_cast %10 : vector<8x256xf32> to vector<1x8x256xf32>
    tpu.vector_store %arg5[%c1_12, %c0_13, %c0_14], %13 {strides = array<i32>} : memref<2x8x256xf32, #tpu.memory_space<vmem>>, vector<1x8x256xf32>,
    %c0_15 = arith.constant 0 : index
    %c0_16 = arith.constant 0 : index
    %c0_17 = arith.constant 0 : index
    %14 = vector.load %arg5[%c0_15, %c0_16, %c0_17] : memref<2x8x256xf32, #tpu.memory_space<vmem>>, vector<2x8x256xf32>
    %cst_18 = arith.constant dense<0.000000e+00> : vector<8x256xf32>
    %15 = vector.multi_reduction <add>, %14, %cst_18 [0] : vector<2x8x256xf32> to vector<8x256xf32>
    %16 = vector.shape_cast %15 : vector<8x256xf32> to vector<1x8x256xf32>
    %cst_19 = arith.constant dense<0.000000e+00> : vector<1x8xf32>
    %17 = vector.multi_reduction <add>, %16, %cst_19 [2] : vector<1x8x256xf32> to vector<1x8xf32>
    %18 = vector.shape_cast %17 : vector<1x8xf32> to vector<1x8x1xf32>
    %cst_20 = arith.constant 0.001953125 : f32
    %19 = vector.broadcast %cst_20 : f32 to vector<1x8x1xf32>
    %20 = arith.mulf %18, %19 : vector<1x8x1xf32>
    %21 = vector.broadcast %20 : vector<1x8x1xf32> to vector<2x8x256xf32>
    %22 = arith.subf %14, %21 : vector<2x8x256xf32>
    %23 = arith.mulf %22, %22 : vector<2x8x256xf32>
    %cst_21 = arith.constant dense<0.000000e+00> : vector<8x256xf32>
    %24 = vector.multi_reduction <add>, %23, %cst_21 [0] : vector<2x8x256xf32> to vector<8x256xf32>
    %25 = vector.shape_cast %24 : vector<8x256xf32> to vector<1x8x256xf32>
    %cst_22 = arith.constant dense<0.000000e+00> : vector<1x8xf32>
    %26 = vector.multi_reduction <add>, %25, %cst_22 [2] : vector<1x8x256xf32> to vector<1x8xf32>
    %27 = vector.shape_cast %26 : vector<1x8xf32> to vector<1x8x1xf32>
    %cst_23 = arith.constant 0.001953125 : f32
    %28 = vector.broadcast %cst_23 : f32 to vector<1x8x1xf32>
    %29 = arith.mulf %27, %28 : vector<1x8x1xf32>
    %c0_24 = arith.constant 0 : index
    %c0_25 = arith.constant 0 : index
    %30 = vector.load %arg3[%c0_24, %c0_25] : memref<8x1xf32, #tpu.memory_space<vmem>>, vector<8x1xf32>
    %31 = vector.shape_cast %30 : vector<8x1xf32> to vector<1x8x1xf32>
    %cst_26 = arith.constant 9.99999974E-6 : f32
    %32 = vector.broadcast %cst_26 : f32 to vector<1x8x1xf32>
    %33 = arith.addf %29, %32 : vector<1x8x1xf32>
    %34 = math.rsqrt %33 : vector<1x8x1xf32>
    %35 = arith.mulf %31, %34 : vector<1x8x1xf32>
    %c0_27 = arith.constant 0 : index
    %c0_28 = arith.constant 0 : index
    %36 = vector.load %arg4[%c0_27, %c0_28] : memref<8x1xf32, #tpu.memory_space<vmem>>, vector<8x1xf32>
    %37 = vector.shape_cast %36 : vector<8x1xf32> to vector<1x8x1xf32>
    %38 = arith.mulf %20, %35 : vector<1x8x1xf32>
    %39 = arith.subf %37, %38 : vector<1x8x1xf32>
    %40 = vector.broadcast %35 : vector<1x8x1xf32> to vector<2x8x256xf32>
    %41 = arith.mulf %14, %40 : vector<2x8x256xf32>
    %42 = vector.broadcast %39 : vector<1x8x1xf32> to vector<2x8x256xf32>
    %43 = arith.addf %41, %42 : vector<2x8x256xf32>
    %cst_29 = arith.constant 0.000000e+00 : f32
    %44 = vector.broadcast %cst_29 : f32 to vector<2x8x256xf32>
    %45 = arith.cmpf oge, %43, %44 : vector<2x8x256xf32>
    %cst_30 = arith.constant 0.00999999977 : f32
    %46 = vector.broadcast %cst_30 : f32 to vector<2x8x256xf32>
    %47 = arith.mulf %46, %43 : vector<2x8x256xf32>
    %48 = arith.select %45, %43, %47 : vector<2x8x256xi1>, vector<2x8x256xf32>
    %c0_31 = arith.constant 0 : index
    %c0_32 = arith.constant 0 : index
    %c0_33 = arith.constant 0 : index
    %49 = vector.load %arg5[%c0_31, %c0_32, %c0_33] : memref<2x8x256xf32, #tpu.memory_space<vmem>>, vector<2x8x256xf32>
    tpu.vector_store %arg5[%c0_31, %c0_32, %c0_33], %48 {strides = array<i32>} : memref<2x8x256xf32, #tpu.memory_space<vmem>>, vector<2x8x256xf32>,
    return
  }
  func.func @transform_0(%arg0: i32) -> (i32, i32, i32) {
    %c0_i32 = arith.constant 0 : i32
    %c0_i32_0 = arith.constant 0 : i32
    %c0_i32_1 = arith.constant 0 : i32
    %c0_i32_2 = arith.constant 0 : i32
    return %c0_i32, %c0_i32_0, %c0_i32_1 : i32, i32, i32
  }
  func.func @transform_1(%arg0: i32) -> (i32, i32) {
    %c0_i32 = arith.constant 0 : i32
    %c0_i32_0 = arith.constant 0 : i32
    %c0_i32_1 = arith.constant 0 : i32
    return %c0_i32, %c0_i32_0 : i32, i32
  }
  func.func @transform_2(%arg0: i32) -> (i32, i32) {
    %c0_i32 = arith.constant 0 : i32
    %c0_i32_0 = arith.constant 0 : i32
    %c0_i32_1 = arith.constant 0 : i32
    return %c0_i32, %c0_i32_0 : i32, i32
  }
  func.func @transform_3(%arg0: i32) -> (i32, i32) {
    %c0_i32 = arith.constant 0 : i32
    %c0_i32_0 = arith.constant 0 : i32
    %c0_i32_1 = arith.constant 0 : i32
    return %c0_i32, %c0_i32_0 : i32, i32
  }
  func.func @transform_4(%arg0: i32) -> (i32, i32, i32) {
    %c0_i32 = arith.constant 0 : i32
    %c0_i32_0 = arith.constant 0 : i32
    %c0_i32_1 = arith.constant 0 : i32
    %c0_i32_2 = arith.constant 0 : i32
    return %c0_i32, %c0_i32_0, %c0_i32_1 : i32, i32, i32
  }
}

</mosaic_0001>

<llo_original>
// kernel: tpu_custom_call.1
$region0: #{tpu_custom_call.1}
  #allocation0 [shape = 'u32[]', space=smem, size = 0x4, offset = 0x4, fixed_abs, tag = 'smem constant byte address 0x4 - core index']
  #allocation1 [shape = 'u32[72,128]{1,0:T(1,128)}', space=vmem, size = 0x9000, scoped, tag = 'internal scratch']
  %s0 = inlined_call_operand.vmem [shape: f32[2,36,256], index: 0, kind: input, shape index: {}]
  %s1 = inlined_call_operand.vmem [shape: f32[8,36], index: 1, kind: input, shape index: {}]
  %s2 = inlined_call_operand.vmem [shape: f32[8,1], index: 2, kind: input, shape index: {}]
  %s3 = inlined_call_operand.vmem [shape: f32[8,1], index: 3, kind: input, shape index: {}]
  %s4 = inlined_call_operand.hbm [shape: f32[2,8,256], index: 4, kind: output, shape index: {}]
  %s5 = sld [smem:[#allocation0]]
  $region26: #{tpu_custom_call.1} parent=0
    _
  %s7 = ssub.s32 1, %s5
  %s8 = scalar_select 0, %s7, %s5
  $region1: #{tpu_custom_call.1} parent=0
    #allocation2 [shape = 'u8[16384]{0}', space=vmem, size = 0x4000, scoped, tag = 'output window, operand 0, single buffered']
    #allocation3 [shape = 's32[1]{0}', space=sflag, size = 0x4, scoped, tag = 'scoped memory for tpu_custom_call.1']
    %9 = vsyncpa [#allocation3], 0
    // Predicated region
    $region2: #{tpu_custom_call.1} parent=1 // pred_check
      _
    $region3: #{tpu_custom_call.1} parent=1 // pred_check_branch
      %11 = sbr.rel (0) target = $region5
    $region4: #{tpu_custom_call.1} parent=1 // pred_region
      _
    $region5: #{tpu_custom_call.1} parent=1 // pred_fallthru
      _
    // Predicated region
    $region6: #{tpu_custom_call.1} parent=1 // pred_check
      _
    $region7: #{tpu_custom_call.1} parent=1 // pred_check_branch
      %13 = sbr.rel (0) target = $region9
    $region8: #{tpu_custom_call.1} parent=1 // pred_region
      _
    $region9: #{tpu_custom_call.1} parent=1 // pred_fallthru
      _
    // Predicated region
    $region10: #{tpu_custom_call.1} parent=1 // pred_check
      _
    $region11: #{tpu_custom_call.1} parent=1 // pred_check_branch
      %15 = sbr.rel (0) target = $region13
    $region12: #{tpu_custom_call.1} parent=1 // pred_region
      _
    $region13: #{tpu_custom_call.1} parent=1 // pred_fallthru
      _
    // Predicated region
    $region14: #{tpu_custom_call.1} parent=1 // pred_check
      _
    $region15: #{tpu_custom_call.1} parent=1 // pred_check_branch
      %17 = sbr.rel (0) target = $region17
    $region16: #{tpu_custom_call.1} parent=1 // pred_region
      _
    $region17: #{tpu_custom_call.1} parent=1 // pred_fallthru
      _
    %v18 = vld [vmem:[%s1] sm:$0xff]
    %v19 = vld [vmem:[%s0] sm:$0xff]
    %v20 = vld [vmem:[%s0 + $0x8] sm:$0xff]
    %v21 = vld [vmem:[%s0 + $0x10] sm:$0xff]
    %v22 = vld [vmem:[%s0 + $0x18] sm:$0xff]
    %v23 = vld [vmem:[%s0 + $0x20] sm:$0xff]
    %v24 = vld [vmem:[%s0 + $0x28] sm:$0xff]
    %v25 = vld [vmem:[%s0 + $0x30] sm:$0xff]
    %v26 = vld [vmem:[%s0 + $0x38] sm:$0xff]
    %v27 = vld [vmem:[%s0 + $0x40] sm:$0xf]
    %v28 = vld [vmem:[%s0 + $0x48] sm:$0xf]
    %vm29 = vcmask 293888
    %v31 = vsel %vm29, %v18, 0
    %vm33 = vcmask 1043456
    %v35 = vsel %vm33, %v27, 0
    %v38 = vsel %vm33, %v28, 0
    %40 = vmatpush.msra.mxu0 0.0
    %41 = vmatpush.msra.mxu0 0.0
    %42 = vmatpush.msra.mxu0 0.0
    %43 = vmatpush.msra.mxu0 0.0
    %44 = vmatpush.msra.mxu0 0.0
    %45 = vmatpush.msra.mxu0 0.0
    %46 = vmatpush.msra.mxu0 0.0
    %47 = vmatpush.msra.mxu0 0.0
    %48 = vmatpush.msra.mxu0 0.0
    %49 = vmatpush.msra.mxu0 0.0
    %50 = vmatpush.msra.mxu0 0.0
    %51 = vmatpush.msra.mxu0 %v35
    %52 = vmatpush.msra.mxu0 %v25
    %53 = vmatpush.msra.mxu0 %v23
    %54 = vmatpush.msra.mxu0 %v21
    %55 = vmatpush.msra.mxu0 %v19
    %56 = vmatmul.f32.gmra.mxu0 %v31
    %v57 = vpop.f32.mrf.mxu0
    %v58 = vadd.f32 0.0, %v57
    %59 = vdwg.mxu0
    %60 = vmatpush.msra.mxu0 0.0
    %61 = vmatpush.msra.mxu0 0.0
    %62 = vmatpush.msra.mxu0 0.0
    %63 = vmatpush.msra.mxu0 0.0
    %64 = vmatpush.msra.mxu0 0.0
    %65 = vmatpush.msra.mxu0 0.0
    %66 = vmatpush.msra.mxu0 0.0
    %67 = vmatpush.msra.mxu0 0.0
    %68 = vmatpush.msra.mxu0 0.0
    %69 = vmatpush.msra.mxu0 0.0
    %70 = vmatpush.msra.mxu0 0.0
    %71 = vmatpush.msra.mxu0 %v38
    %72 = vmatpush.msra.mxu0 %v26
    %73 = vmatpush.msra.mxu0 %v24
    %74 = vmatpush.msra.mxu0 %v22
    %75 = vmatpush.msra.mxu0 %v20
    %76 = vmatmul.f32.gmra.mxu0 %v31
    %v77 = vpop.f32.mrf.mxu0
    %v78 = vadd.f32 0.0, %v77
    %79 = vdwg.mxu0
    %80 = vst [vmem:[#allocation2] sm:$0xff] %v58
    %81 = vst [vmem:[#allocation2 + $0x8] sm:$0xff] %v78
    %v82 = vld [vmem:[%s1] sm:$0xff]
    %s83 = scalar_lea.vmem %s0, 80
    %v84 = vld [vmem:[%s83] sm:$0xff]
    %v85 = vld [vmem:[%s83 + $0x8] sm:$0xff]
    %v86 = vld [vmem:[%s83 + $0x10] sm:$0xff]
    %v87 = vld [vmem:[%s83 + $0x18] sm:$0xff]
    %v88 = vld [vmem:[%s83 + $0x20] sm:$0xff]
    %v89 = vld [vmem:[%s83 + $0x28] sm:$0xff]
    %v90 = vld [vmem:[%s83 + $0x30] sm:$0xff]
    %v91 = vld [vmem:[%s83 + $0x38] sm:$0xff]
    %v92 = vld [vmem:[%s83 + $0x40] sm:$0xf]
    %v93 = vld [vmem:[%s83 + $0x48] sm:$0xf]
    %v95 = vsel %vm29, %v82, 0
    %v98 = vsel %vm33, %v92, 0
    %v101 = vsel %vm33, %v93, 0
    %103 = vmatpush.msra.mxu0 0.0
    %104 = vmatpush.msra.mxu0 0.0
    %105 = vmatpush.msra.mxu0 0.0
    %106 = vmatpush.msra.mxu0 0.0
    %107 = vmatpush.msra.mxu0 0.0
    %108 = vmatpush.msra.mxu0 0.0
    %109 = vmatpush.msra.mxu0 0.0
    %110 = vmatpush.msra.mxu0 0.0
    %111 = vmatpush.msra.mxu0 0.0
    %112 = vmatpush.msra.mxu0 0.0
    %113 = vmatpush.msra.mxu0 0.0
    %114 = vmatpush.msra.mxu0 %v98
    %115 = vmatpush.msra.mxu0 %v90
    %116 = vmatpush.msra.mxu0 %v88
    %117 = vmatpush.msra.mxu0 %v86
    %118 = vmatpush.msra.mxu0 %v84
    %119 = vmatmul.f32.gmra.mxu0 %v95
    %v120 = vpop.f32.mrf.mxu0
    %v121 = vadd.f32 0.0, %v120
    %122 = vdwg.mxu0
    %123 = vmatpush.msra.mxu0 0.0
    %124 = vmatpush.msra.mxu0 0.0
    %125 = vmatpush.msra.mxu0 0.0
    %126 = vmatpush.msra.mxu0 0.0
    %127 = vmatpush.msra.mxu0 0.0
    %128 = vmatpush.msra.mxu0 0.0
    %129 = vmatpush.msra.mxu0 0.0
    %130 = vmatpush.msra.mxu0 0.0
    %131 = vmatpush.msra.mxu0 0.0
    %132 = vmatpush.msra.mxu0 0.0
    %133 = vmatpush.msra.mxu0 0.0
    %134 = vmatpush.msra.mxu0 %v101
    %135 = vmatpush.msra.mxu0 %v91
    %136 = vmatpush.msra.mxu0 %v89
    %137 = vmatpush.msra.mxu0 %v87
    %138 = vmatpush.msra.mxu0 %v85
    %139 = vmatmul.f32.gmra.mxu0 %v95
    %v140 = vpop.f32.mrf.mxu0
    %v141 = vadd.f32 0.0, %v140
    %142 = vdwg.mxu0
    %s143 = scalar_lea.vmem [#allocation2], 16
    %144 = vst [vmem:[%s143] sm:$0xff] %v121
    %145 = vst [vmem:[%s143 + $0x8] sm:$0xff] %v141
    %v146 = vld [vmem:[#allocation2] sm:$0xff]
    %v147 = vld [vmem:[#allocation2 + $0x8] sm:$0xff]
    %v148 = vld [vmem:[#allocation2 + $0x10] sm:$0xff]
    %v149 = vld [vmem:[#allocation2 + $0x18] sm:$0xff]
    %v150 = vadd.f32 %v146, %v148
    %v151 = vadd.f32 %v147, %v149
    %v152 = vadd.f32 %v150, %v151
    %153 = vadd.xlane.f32.xlu0 %v152
    %v154 = vpop.xlane.xlu0 %153
    %v155 = vmul.f32 %v154, 0.001953125
    %v156 = vsub.f32 %v146, %v155
    %v157 = vsub.f32 %v147, %v155
    %v158 = vsub.f32 %v148, %v155
    %v159 = vsub.f32 %v149, %v155
    %v160 = vmul.f32 %v156, %v156
    %v161 = vmul.f32 %v157, %v157
    %v162 = vmul.f32 %v158, %v158
    %v163 = vmul.f32 %v159, %v159
    %v164 = vadd.f32 %v160, %v162
    %v165 = vadd.f32 %v161, %v163
    %v166 = vadd.f32 %v164, %v165
    %167 = vadd.xlane.f32.xlu0 %v166
    %v168 = vpop.xlane.xlu0 %167
    %v169 = vmul.f32 %v168, 0.001953125
    %v170 = vld [vmem:[%s2] sm:$0xff]
    %v171 = vadd.f32 %v169, 1e-05
    %v172 = vrsqrt.pop %v171
    %v173 = vmul.f32 %v172, %v171
    %v174 = vmul.f32 %v173, %v172
    %v175 = vmul.f32 0.5, %v174
    %v176 = vsub.f32 1.5, %v175
    %v177 = vmul.f32 %v172, %v176
    %vm178 = vweird.f32 %v171
    %vm179 = vweird.f32 %v172
    %vm180 = vmor %vm178, %vm179
    %v181 = vsel %vm180, %v172, %v177
    %v182 = vmul.f32 %v170, %v181
    %v183 = vld [vmem:[%s3] sm:$0xff]
    %v184 = vmul.f32 %v155, %v182
    %v185 = vsub.f32 %v183, %v184
    %187 = vset.pattern.permute.xlu0 0
    %188 = vperm.xlu0 %187, %v182
    %v189 = vpop.permute.xlu0 %188
    %v191 = vmul.f32 %v146, %v189
    %v192 = vmul.f32 %v147, %v189
    %v193 = vmul.f32 %v148, %v189
    %v194 = vmul.f32 %v149, %v189
    %196 = vset.pattern.permute.xlu0 0
    %197 = vperm.xlu0 %196, %v185
    %v198 = vpop.permute.xlu0 %197
    %v200 = vadd.f32 %v191, %v198
    %v201 = vadd.f32 %v192, %v198
    %v202 = vadd.f32 %v193, %v198
    %v203 = vadd.f32 %v194, %v198
    %vm204 = vcmp.ge.f32.partialorder %v200, 0.0
    %vm205 = vcmp.ge.f32.partialorder %v201, 0.0
    %vm206 = vcmp.ge.f32.partialorder %v202, 0.0
    %vm207 = vcmp.ge.f32.partialorder %v203, 0.0
    %v208 = vmul.f32 %v200, 0.01
    %v209 = vmul.f32 %v201, 0.01
    %v210 = vmul.f32 %v202, 0.01
    %v211 = vmul.f32 %v203, 0.01
    %v212 = vsel %vm204, %v200, %v208
    %v213 = vsel %vm205, %v201, %v209
    %v214 = vsel %vm206, %v202, %v210
    %v215 = vsel %vm207, %v203, %v211
    %216 = vst [vmem:[#allocation2] sm:$0xff] %v212
    %217 = vst [vmem:[#allocation2 + $0x8] sm:$0xff] %v213
    %218 = vst [vmem:[#allocation2 + $0x10] sm:$0xff] %v214
    %219 = vst [vmem:[#allocation2 + $0x18] sm:$0xff] %v215
    // Predicated region
    $region18: #{tpu_custom_call.1} parent=1 // pred_check
      _
    $region19: #{tpu_custom_call.1} parent=1 // pred_check_branch
      %221 = sbr.rel (0) target = $region21
    $region20: #{tpu_custom_call.1} parent=1 // pred_region
      %223 = vsyncadd [#allocation3], 0
      %s224 = sshll.u32 [#allocation2], 4
      %s225 = int_to_ptr.vmem [resolvable:$true] %s224
      %s226 = sshll.u32 %s4, 4
      %s227 = int_to_ptr.hbm [resolvable:$true] %s226
      %232 = dma.vmem_to_hbm [thread:$0]  %s225, 512, %s227, [#allocation3], 256, 256, 16
    $region21: #{tpu_custom_call.1} parent=1 // pred_fallthru
      _
    // Predicated region
    $region22: #{tpu_custom_call.1} parent=1 // pred_check
      _
    $region23: #{tpu_custom_call.1} parent=1 // pred_check_branch
      %234 = sbr.rel (0) target = $region25
    $region24: #{tpu_custom_call.1} parent=1 // pred_region
      %236 = dma.done [#allocation3], 512
    $region25: #{tpu_custom_call.1} parent=1 // pred_fallthru
      _
    %237 = vsyncpa [#allocation3], 1

</llo_original>
